<compile_context>
chip_gen: v7x
topology: tpu7x:2x2x1
jax: 0.10.0
libtpu: 0.0.40
codegen_flags: <defaults>
</compile_context>

<pallas_src>
import jax
import jax.numpy as jnp
from jax.experimental import pallas as pl
from jax.experimental.pallas import tpu as pltpu


def _upmatmul_kernel(w_ref, x_ref, o_ref):
    # w_ref: (K, Cin) full weight (grid-invariant)
    # x_ref: (1, Cin, tile) input columns for this (n, spatial-tile)
    # o_ref: (1, K, tile)   lane-dense output tile
    o_ref[0] = jnp.dot(
        w_ref[...], x_ref[0], preferred_element_type=jnp.float32
    ).astype(o_ref.dtype)


def _pick_tile(s_pad, cin, k, in_itemsize, out_itemsize):
    """Largest lane-aligned spatial tile whose double-buffered x+out fit VMEM."""
    per_col = 2 * (cin * in_itemsize + k * out_itemsize)  # double-buffered bytes/column
    budget = 12 * 1024 * 1024  # stay under even v5e's 16 MiB scoped-VMEM default
    max_cols = max(budget // per_col, 128)
    for t in (4096, 2048, 1024, 512, 256, 128):
        if t <= max_cols and s_pad % t == 0:
            return t
    return 128  # s_pad is always a multiple of 128


def _pallas_upconv_matmul(x3, wm, *, tile):
    """x3: (N, Cin, S) with S % tile == 0; wm: (K, Cin).  Returns (N, K, S)."""
    N, Cin, S = x3.shape
    K, _ = wm.shape
    return pl.pallas_call(
        _upmatmul_kernel,
        out_shape=jax.ShapeDtypeStruct((N, K, S), x3.dtype),
        grid_spec=pltpu.PrefetchScalarGridSpec(
            num_scalar_prefetch=0,
            grid=(N, S // tile),
            in_specs=[
                pl.BlockSpec((K, Cin), lambda n, s: (0, 0)),        # invariant weight
                pl.BlockSpec((1, Cin, tile), lambda n, s: (n, 0, s)),
            ],
            out_specs=pl.BlockSpec((1, K, tile), lambda n, s: (n, 0, s)),
        ),
        compiler_params=pltpu.CompilerParams(
            dimension_semantics=("parallel", "parallel"),
        ),
    )(wm, x3)


def unet_out_up_block(inp, weight):
    """Forward of UnetOutUpBlock (ConvTranspose3d, stride == kernel, no bias).

    inp:    (N, Cin, D, H, W)        -- NCDHW, matches PyTorch
    weight: (Cin, Cout, kd, kh, kw)  -- PyTorch ConvTranspose3d weight layout
    returns (N, Cout, D*kd, H*kh, W*kw), same dtype as inp
    """
    N, Cin, D, H, W = inp.shape
    Cin_w, Cout, kd, kh, kw = weight.shape
    assert Cin_w == Cin
    K = Cout * kd * kh * kw
    S = D * H * W
    compute_dtype = inp.dtype

    # (K, Cin): puts the big spatial axis on lanes of the output.
    wm = jnp.transpose(weight.reshape(Cin, K)).astype(compute_dtype)
    # Pure view of NCDHW -- no input transpose pass.
    x3 = inp.reshape(N, Cin, S)

    # Pad spatial axis to a multiple of 128 lanes (masked/tail-free tiling).
    s_pad = ((S + 127) // 128) * 128
    if s_pad != S:
        x3 = jnp.pad(x3, ((0, 0), (0, 0), (0, s_pad - S)))

    itemsize = jnp.dtype(compute_dtype).itemsize
    tile = _pick_tile(s_pad, Cin, K, itemsize, itemsize)

    y = _pallas_upconv_matmul(x3, wm, tile=tile)  # (N, K, s_pad), inp.dtype

    # Scatter non-overlapping patches back to NCDHW.
    y = y[:, :, :S].reshape(N, Cout, kd, kh, kw, D, H, W)
    # TODO(synk): fuse this patch-scatter into the pallas output DMA; it needs an
    # in-kernel (kd,kh,kw,D,H,W)->(D,kd,H,kh,W,kw) relayout which Mosaic does not
    # lower cleanly today, so it stays as one XLA transpose over the output.
    y = jnp.transpose(y, (0, 1, 5, 2, 6, 3, 7, 4))
    return y.reshape(N, Cout, D * kd, H * kh, W * kw)


def _reference(inp, weight):
    # Pure-JAX reference of the stride==kernel transposed conv.
    N, Cin, D, H, W = inp.shape
    _, Cout, kd, kh, kw = weight.shape
    # out[n,o,d,i,h,j,w,l] = sum_c x[n,c,d,h,w] * W[c,o,i,j,l]
    y = jnp.einsum("ncdhw,coijk->nodihjwk", inp, weight)
    return y.reshape(N, Cout, D * kd, H * kh, W * kw)


if __name__ == "__main__":
    key = jax.random.PRNGKey(0)
    k_x, k_w = jax.random.split(key)

    # spatial_dims=3, in_channels=8, out_channels=4, upsample_kernel_size=2
    N, Cin, Cout = 2, 8, 4
    D = H = W = 4
    k = 2

    inp = jax.random.normal(k_x, (N, Cin, D, H, W), dtype=jnp.float32)
    # PyTorch ConvTranspose3d weight shape: (in_channels, out_channels, kD, kH, kW)
    weight = (jax.random.normal(k_w, (Cin, Cout, k, k, k), dtype=jnp.float32)
              * (1.0 / jnp.sqrt(Cin * k * k * k)))

    out = unet_out_up_block(inp, weight)
    out = jax.block_until_ready(out)

    ref = _reference(inp, weight)
    assert out.shape == (N, Cout, D * k, H * k, W * k), out.shape
    assert out.dtype == inp.dtype, out.dtype
    assert jnp.allclose(out, ref, atol=1e-4, rtol=1e-4), "mismatch vs reference"

    print("KERNEL_OK")
</pallas_src>

<mosaic_0001>
module attributes {stable_mosaic.version = 11 : i64} {
  func.func @_upmatmul_kernel(%arg0: i32, %arg1: i32, %arg2: memref<32x8xf32, #tpu.memory_space<vmem>>, %arg3: memref<1x8x128xf32, #tpu.memory_space<vmem>>, %arg4: memref<1x32x128xf32, #tpu.memory_space<vmem>>) attributes {dimension_semantics = [#tpu.dimension_semantics<parallel>, #tpu.dimension_semantics<parallel>], iteration_bounds = array<i64: 2, 1>, scalar_prefetch = 0 : i64, scratch_operands = 0 : i64, tpu.core_type = #tpu.core_type<tc>, window_params = [{pipeline_mode = #tpu.pipeline_mode<synchronous>, transform_indices = @transform_0, window_bounds = array<i64: 32, 8>}, {transform_indices = @transform_1, window_bounds = array<i64: 1, 8, 128>}, {transform_indices = @transform_2, window_bounds = array<i64: 1, 32, 128>}]} {
    %c0 = arith.constant 0 : index
    %c0_0 = arith.constant 0 : index
    %0 = vector.load %arg2[%c0, %c0_0] : memref<32x8xf32, #tpu.memory_space<vmem>>, vector<32x8xf32>
    %c0_1 = arith.constant 0 : index
    %c0_2 = arith.constant 0 : index
    %c0_3 = arith.constant 0 : index
    %1 = vector.load %arg3[%c0_1, %c0_2, %c0_3] : memref<1x8x128xf32, #tpu.memory_space<vmem>>, vector<1x8x128xf32>
    %2 = vector.shape_cast %1 : vector<1x8x128xf32> to vector<8x128xf32>
    %cst = arith.constant dense<0.000000e+00> : vector<32x128xf32>
    %3 = tpu.matmul %0, %2, %cst {dimension_numbers = #tpu.dot_dimension_numbers<[1], [0], [0], [1], [0, 0, 1, 1], [], []>} : vector<32x8xf32>, vector<8x128xf32>, vector<32x128xf32> -> vector<32x128xf32>
    %c0_4 = arith.constant 0 : index
    %c0_5 = arith.constant 0 : index
    %c0_6 = arith.constant 0 : index
    %4 = vector.load %arg4[%c0_4, %c0_5, %c0_6] : memref<1x32x128xf32, #tpu.memory_space<vmem>>, vector<1x32x128xf32>
    %5 = vector.shape_cast %4 : vector<1x32x128xf32> to vector<32x128xf32>
    %6 = vector.shape_cast %3 : vector<32x128xf32> to vector<1x32x128xf32>
    tpu.vector_store %arg4[%c0_4, %c0_5, %c0_6], %6 {strides = array<i32>} : memref<1x32x128xf32, #tpu.memory_space<vmem>>, vector<1x32x128xf32>,
    return
  }
  func.func @transform_0(%arg0: i32, %arg1: i32) -> (i32, i32) {
    %c0_i32 = arith.constant 0 : i32
    %c0_i32_0 = arith.constant 0 : i32
    %c0_i32_1 = arith.constant 0 : i32
    return %c0_i32, %c0_i32_0 : i32, i32
  }
  func.func @transform_1(%arg0: i32, %arg1: i32) -> (i32, i32, i32) {
    %c0_i32 = arith.constant 0 : i32
    %c0_i32_0 = arith.constant 0 : i32
    return %arg0, %c0_i32, %arg1 : i32, i32, i32
  }
  func.func @transform_2(%arg0: i32, %arg1: i32) -> (i32, i32, i32) {
    %c0_i32 = arith.constant 0 : i32
    %c0_i32_0 = arith.constant 0 : i32
    return %arg0, %c0_i32, %arg1 : i32, i32, i32
  }
}

</mosaic_0001>

<llo_original>
// kernel: tpu_custom_call.1
$region0: #{tpu_custom_call.1}
  #allocation0 [shape = 'u32[]', space=smem, size = 0x4, offset = 0x4, fixed_abs, tag = 'smem constant byte address 0x4 - core index']
  #allocation1 [shape = 'u32[144,128]{1,0:T(1,128)}', space=vmem, size = 0x12000, scoped, tag = 'internal scratch']
  %s0 = inlined_call_operand.vmem [shape: f32[32,8], index: 0, kind: input, shape index: {}]
  %s1 = inlined_call_operand.vmem [shape: f32[2,8,128], index: 1, kind: input, shape index: {}]
  %s2 = inlined_call_operand.hbm [shape: f32[2,32,128], index: 2, kind: output, shape index: {}]
  %s3 = sld [smem:[#allocation0]]
  $region41: #{tpu_custom_call.1} parent=0
    _
  %s5 = ssub.s32 1, %s3
  %s6 = scalar_select 0, %s5, %s3
  $region1: #{tpu_custom_call.1} parent=0
    #allocation2 [shape = 'u8[32768]{0}', space=vmem, size = 0x8000, scoped, tag = 'output window, operand 0']
    #allocation3 [shape = 's32[2]{0}', space=sflag, size = 0x8, scoped, tag = 'scoped memory for tpu_custom_call.1']
    %7 = vsyncpa [#allocation3], 0
    %s8 = scalar_lea.sflag [#allocation3], 1
    %9 = vsyncpa %s8, 0
    loop: start=0, step=1, limit=4
    $region2: #{tpu_custom_call.1} parent=1 // loop_pre_header
      _
    $region3: #{tpu_custom_call.1} parent=1 // loop_header
      %s11 = sphi 0, %s15
      %p12 = scmp.ge.s32.totalorder %s11, 4
      %s18 = sphi 0, %s30
      %s19 = sphi 0, %s26
      %s20 = sphi 0, %s18
      %s21 = sphi 0, %s19
      %s22 = sphi 0, %s20
      %s23 = sphi 0, %s21
      %s31 = sphi 0, %s31
      %s33 = sphi 0, %s31
      %s34 = sphi 0, %s33
      %s48 = sphi 0, %s34
      %s56 = sphi 0, %s58
      %s59 = sphi 0, %s56
      %s60 = sphi 0, %s59
      %s76 = sphi 0, %s60
      %s84 = sphi 0, %s86
      %s87 = sphi 0, %s84
      %s88 = sphi 0, %s87
      %s104 = sphi 0, %s88
    $region4: #{tpu_custom_call.1} parent=1 // loop_header_branch
      %14 = sbr.rel (%p12) target = $region8
    $region5: #{tpu_custom_call.1} parent=1 // loop_body
      %s16 = ssub.s32 %s11, 1
      %s17 = ssub.s32 %s11, 2
      %s24 = sadd.s32 1, %s19
      %p25 = scmp.ge.s32.totalorder %s24, 1
      %s26 = scalar_select %p25, 0, %s24
      %s27 = sadd.s32 1, %s18
      %s28 = scalar_select %p25, %s27, %s18
      %p29 = scmp.ge.s32.totalorder %s28, 2
      %s30 = scalar_select %p29, 0, %s28
      %s32 = sadd.s32 %s31, 1
      %p35 = scmp.eq.s32.totalorder %s11, 1
      %p36 = scmp.ne.s32.totalorder %s31, %s33
      %p37 = scmp.eq.s32.totalorder %s11, 0
      %p38 = por %p36, %p37
      %p39 = scmp.ne.s32.totalorder %s31, %s33
      %p40 = scmp.eq.s32.totalorder %s16, 1
      %p41 = por %p39, %p40
      %p42 = scmp.ne.s32.totalorder %s33, %s34
      %p43 = scmp.eq.s32.totalorder %s16, 0
      %p44 = por %p42, %p43
      %p45 = scmp.ne.s32.totalorder %s33, %s34
      %p46 = scmp.eq.s32.totalorder %s17, 1
      %p47 = por %p45, %p46
      %p49 = scmp.ne.s32.totalorder %s34, %s48
      %p50 = scmp.eq.s32.totalorder %s17, 0
      %p51 = por %p49, %p50
      %s52 = ssub.s32 %s18, %s30
      %s53 = ssub.s32 %s19, %s26
      %s54 = sor.u32 %s52, %s53
      %p55 = scmp.eq.s32.totalorder %s54, 0
      %s57 = sadd.s32 %s56, 1
      %s58 = scalar_select %p55, %s56, %s57
      %p61 = pneg %p55
      %p62 = scmp.eq.s32.totalorder %s11, 1
      %p63 = por %p61, %p62
      %p64 = scmp.ne.s32.totalorder %s56, %s59
      %p65 = scmp.eq.s32.totalorder %s11, 0
      %p66 = por %p64, %p65
      %p67 = scmp.ne.s32.totalorder %s56, %s59
      %p68 = scmp.eq.s32.totalorder %s16, 1
      %p69 = por %p67, %p68
      %p70 = scmp.ne.s32.totalorder %s59, %s60
      %p71 = scmp.eq.s32.totalorder %s16, 0
      %p72 = por %p70, %p71
      %p73 = scmp.ne.s32.totalorder %s59, %s60
      %p74 = scmp.eq.s32.totalorder %s17, 1
      %p75 = por %p73, %p74
      %p77 = scmp.ne.s32.totalorder %s60, %s76
      %p78 = scmp.eq.s32.totalorder %s17, 0
      %p79 = por %p77, %p78
      %s80 = ssub.s32 %s18, %s30
      %s81 = ssub.s32 %s19, %s26
      %s82 = sor.u32 %s80, %s81
      %p83 = scmp.eq.s32.totalorder %s82, 0
      %s85 = sadd.s32 %s84, 1
      %s86 = scalar_select %p83, %s84, %s85
      %p89 = pneg %p83
      %p90 = scmp.eq.s32.totalorder %s11, 1
      %p91 = por %p89, %p90
      %p92 = scmp.ne.s32.totalorder %s84, %s87
      %p93 = scmp.eq.s32.totalorder %s11, 0
      %p94 = por %p92, %p93
      %p95 = scmp.ne.s32.totalorder %s84, %s87
      %p96 = scmp.eq.s32.totalorder %s16, 1
      %p97 = por %p95, %p96
      %p98 = scmp.ne.s32.totalorder %s87, %s88
      %p99 = scmp.eq.s32.totalorder %s16, 0
      %p100 = por %p98, %p99
      %p101 = scmp.ne.s32.totalorder %s87, %s88
      %p102 = scmp.eq.s32.totalorder %s17, 1
      %p103 = por %p101, %p102
      %p105 = scmp.ne.s32.totalorder %s88, %s104
      %p106 = scmp.eq.s32.totalorder %s17, 0
      %p107 = por %p105, %p106
      %p108 = scmp.le.s32.totalorder 1, %s11
      %p109 = scmp.lt.s32.totalorder %s11, 3
      %p110 = pnand %p108, %p109
      %p111 = pneg %p110
      // Predicated region
      $region9: #{tpu_custom_call.1} parent=5 // pred_check
        _
      $region10: #{tpu_custom_call.1} parent=5 // pred_check_branch
        %113 = sbr.rel (%p110) target = $region12
      $region11: #{tpu_custom_call.1} parent=5 // pred_region
        %s114 = ssub.s32 %s11, 1
        // Predicated region
        $region13: #{tpu_custom_call.1} parent=11 // pred_check
          %p115 = pneg %p44
        $region14: #{tpu_custom_call.1} parent=11 // pred_check_branch
          %117 = sbr.rel (%p115) target = $region16
        $region15: #{tpu_custom_call.1} parent=11 // pred_region
          _
        $region16: #{tpu_custom_call.1} parent=11 // pred_fallthru
          _
      $region12: #{tpu_custom_call.1} parent=5 // pred_fallthru
        _
      %p118 = scmp.lt.s32.totalorder %s11, 2
      // Predicated region
      $region17: #{tpu_custom_call.1} parent=5 // pred_check
        %p119 = pneg %p118
      $region18: #{tpu_custom_call.1} parent=5 // pred_check_branch
        %121 = sbr.rel (%p119) target = $region20
      $region19: #{tpu_custom_call.1} parent=5 // pred_region
        // Predicated region
        $region21: #{tpu_custom_call.1} parent=19 // pred_check
          %p122 = pneg %p66
        $region22: #{tpu_custom_call.1} parent=19 // pred_check_branch
          %124 = sbr.rel (%p122) target = $region24
        $region23: #{tpu_custom_call.1} parent=19 // pred_region
          %p125 = scmp.lt.s32.totalorder %s18, 1
          %s126 = scalar_select %p125, %s18, 1
          %p127 = scmp.lt.s32.totalorder %s19, 0
          %s128 = scalar_select %p127, %s19, 0
          %s129 = sadd.s32 %s128, %s126
          %s130 = smul.addr %s129, 8
          %s131 = scalar_lea.vmem %s1, %s130
        $region24: #{tpu_custom_call.1} parent=19 // pred_fallthru
          _
      $region20: #{tpu_custom_call.1} parent=5 // pred_fallthru
        _
      %p132 = scmp.le.s32.totalorder 1, %s11
      %p133 = scmp.lt.s32.totalorder %s11, 3
      %p134 = pnand %p132, %p133
      %p135 = pneg %p134
      // Predicated region
      $region25: #{tpu_custom_call.1} parent=5 // pred_check
        _
      $region26: #{tpu_custom_call.1} parent=5 // pred_check_branch
        %137 = sbr.rel (%p134) target = $region28
      $region27: #{tpu_custom_call.1} parent=5 // pred_region
        %s138 = ssub.s32 %s11, 1
        %p139 = pneg %p44
        %p140 = pneg %p41
        %p141 = scmp.lt.s32.totalorder %s20, 1
        %s142 = scalar_select %p141, %s20, 1
        %p143 = scmp.lt.s32.totalorder %s21, 0
        %s144 = scalar_select %p143, %s21, 0
        %s145 = sadd.s32 %s144, %s142
        %s146 = smul.addr %s145, 8
        %s147 = scalar_lea.vmem %s1, %s146
        %p148 = pneg %p72
        %p149 = pneg %p69
        %p150 = pneg %p100
        %p151 = pneg %p97
        %s152 = sand.u32 %s87, 1
        %s153 = scalar_lea.sflag [#allocation3], %s152
        %s154 = sand.u32 %s87, 1
        %s155 = smul.addr %s154, 32
        %s156 = scalar_lea.vmem [#allocation2], %s155
        %p157 = scmp.lt.s32.totalorder %s20, 1
        %s158 = scalar_select %p157, %s20, 1
        %p159 = scmp.lt.s32.totalorder %s21, 0
        %s160 = scalar_select %p159, %s21, 0
        %s161 = sadd.s32 %s160, %s158
        %s162 = smul.addr %s161, 8
        %s163 = scalar_lea.vmem %s1, %s162
        %v164 = vld [vmem:[%s0] sm:$0xff]
        %v165 = vld [vmem:[%s0 + $0x8] sm:$0xff]
        %v166 = vld [vmem:[%s0 + $0x10] sm:$0xff]
        %v167 = vld [vmem:[%s0 + $0x18] sm:$0xff]
        %v168 = vld [vmem:[%s163] sm:$0xff]
        %vm169 = vcmask 64512
        %v171 = vsel %vm169, %v164, 0
        %v174 = vsel %vm169, %v165, 0
        %v177 = vsel %vm169, %v166, 0
        %v180 = vsel %vm169, %v167, 0
        %182 = vmatprep.subr.mxu0 0.0
        %183 = vmatpush1.msra.mxu0 %v168
        %184 = vmatprep.subr.mxu0 0.0
        %185 = vmatpush1.msra.mxu0 0.0
        %186 = vmatprep.subr.mxu0 0.0
        %187 = vmatpush1.msra.mxu0 0.0
        %188 = vmatprep.subr.mxu0 0.0
        %189 = vmatpush1.msra.mxu0 0.0
        %190 = vmatprep.subr.mxu0 0.0
        %191 = vmatpush1.msra.mxu0 0.0
        %192 = vmatprep.subr.mxu0 0.0
        %193 = vmatpush1.msra.mxu0 0.0
        %194 = vmatprep.subr.mxu0 0.0
        %195 = vmatpush1.msra.mxu0 0.0
        %196 = vmatprep.subr.mxu0 0.0
        %197 = vmatpush1.msra.mxu0 0.0
        %198 = vmatprep.subr.mxu0 0.0
        %199 = vmatpush1.msra.mxu0 0.0
        %200 = vmatprep.subr.mxu0 0.0
        %201 = vmatpush1.msra.mxu0 0.0
        %202 = vmatprep.subr.mxu0 0.0
        %203 = vmatpush1.msra.mxu0 0.0
        %204 = vmatprep.subr.mxu0 0.0
        %205 = vmatpush1.msra.mxu0 0.0
        %206 = vmatprep.subr.mxu0 0.0
        %207 = vmatpush1.msra.mxu0 0.0
        %208 = vmatprep.subr.mxu0 0.0
        %209 = vmatpush1.msra.mxu0 0.0
        %210 = vmatprep.subr.mxu0 0.0
        %211 = vmatpush1.msra.mxu0 0.0
        %212 = vmatprep.subr.mxu0 0.0
        %213 = vmatpush1.msra.mxu0 0.0
        %214 = vmatprep.subr.mxu0 0.0
        %215 = vmatpush1.msra.mxu0 0.0
        %216 = vmatprep.subr.mxu0 0.0
        %217 = vmatpush1.msra.mxu0 0.0
        %218 = vmatprep.subr.mxu0 0.0
        %219 = vmatpush1.msra.mxu0 0.0
        %220 = vmatprep.subr.mxu0 0.0
        %221 = vmatpush1.msra.mxu0 0.0
        %222 = vmatprep.subr.mxu0 0.0
        %223 = vmatpush1.msra.mxu0 0.0
        %224 = vmatprep.subr.mxu0 0.0
        %225 = vmatpush1.msra.mxu0 0.0
        %226 = vmatprep.subr.mxu0 0.0
        %227 = vmatpush1.msra.mxu0 0.0
        %228 = vmatprep.subr.mxu0 0.0
        %229 = vmatpush1.msra.mxu0 0.0
        %230 = vmatprep.subr.mxu0 0.0
        %231 = vmatpush1.msra.mxu0 0.0
        %232 = vmatprep.subr.mxu0 0.0
        %233 = vmatpush1.msra.mxu0 0.0
        %234 = vmatprep.subr.mxu0 0.0
        %235 = vmatpush1.msra.mxu0 0.0
        %236 = vmatprep.subr.mxu0 0.0
        %237 = vmatpush1.msra.mxu0 0.0
        %238 = vmatprep.subr.mxu0 0.0
        %239 = vmatpush1.msra.mxu0 0.0
        %240 = vmatprep.subr.mxu0 0.0
        %241 = vmatpush1.msra.mxu0 0.0
        %242 = vmatprep.subr.mxu0 0.0
        %243 = vmatpush1.msra.mxu0 0.0
        %244 = vmatprep.subr.mxu0 0.0
        %245 = vmatpush1.msra.mxu0 0.0
        %246 = vmatprep.mubr.f32.mxu0 0.0
        %247 = vmatmul.mubr.f32.gmra.mrb[0].mxu0 %v171
        %v248 = vpop.f32.mrb[0].mxu0
        %v249 = vadd.f32 0.0, %v248
        %v250 = vpop.f32.mrb[0].mxu0
        %251 = vmatprep.mubr.f32.mxu0 0.0
        %252 = vmatmul.mubr.f32.gmra.mrb[0].mxu0 %v174
        %v253 = vpop.f32.mrb[0].mxu0
        %v254 = vadd.f32 0.0, %v253
        %v255 = vpop.f32.mrb[0].mxu0
        %256 = vmatprep.mubr.f32.mxu0 0.0
        %257 = vmatmul.mubr.f32.gmra.mrb[0].mxu0 %v177
        %v258 = vpop.f32.mrb[0].mxu0
        %v259 = vadd.f32 0.0, %v258
        %v260 = vpop.f32.mrb[0].mxu0
        %261 = vmatprep.mubr.f32.mxu0 0.0
        %262 = vmatmul.mubr.f32.gmra.mrb[0].mxu0 %v180
        %v263 = vpop.f32.mrb[0].mxu0
        %v264 = vadd.f32 0.0, %v263
        %v265 = vpop.f32.mrb[0].mxu0
        %266 = vdwg.mxu0
        %267 = vst [vmem:[%s156] sm:$0xff] %v249
        %268 = vst [vmem:[%s156 + $0x8] sm:$0xff] %v254
        %269 = vst [vmem:[%s156 + $0x10] sm:$0xff] %v259
        %270 = vst [vmem:[%s156 + $0x18] sm:$0xff] %v264
        %s271 = sand.u32 %s87, 1
        %s272 = scalar_lea.sflag [#allocation3], %s271
        %s273 = sand.u32 %s87, 1
        %s274 = smul.addr %s273, 32
        %s275 = scalar_lea.vmem [#allocation2], %s274
        // Predicated region
        $region29: #{tpu_custom_call.1} parent=27 // pred_check
          %p276 = pneg %p97
        $region30: #{tpu_custom_call.1} parent=27 // pred_check_branch
          %278 = sbr.rel (%p276) target = $region32
        $region31: #{tpu_custom_call.1} parent=27 // pred_region
          %s280 = ssub.s32 512, 512
          %281 = vsyncadd %s272, %s280
          %s282 = smul.addr %s20, 4
          %s283 = sadd.s32 %s21, %s282
          %s284 = smul.addr %s283, 128
          %s285 = scalar_lea.hbm %s2, %s284
          %s286 = sshll.u32 %s275, 4
          %s287 = int_to_ptr.vmem [resolvable:$true] %s286
          %292 = dma.vmem_to_hbm [thread:$0]  %s287, 512, %s285, %s272, 128, 128, 8
        $region32: #{tpu_custom_call.1} parent=27 // pred_fallthru
          _
      $region28: #{tpu_custom_call.1} parent=5 // pred_fallthru
        _
      %p293 = scmp.le.s32.totalorder 2, %s11
      // Predicated region
      $region33: #{tpu_custom_call.1} parent=5 // pred_check
        %p294 = pneg %p293
      $region34: #{tpu_custom_call.1} parent=5 // pred_check_branch
        %296 = sbr.rel (%p294) target = $region36
      $region35: #{tpu_custom_call.1} parent=5 // pred_region
        %s297 = ssub.s32 %s11, 2
        // Predicated region
        $region37: #{tpu_custom_call.1} parent=35 // pred_check
          %p298 = pneg %p103
        $region38: #{tpu_custom_call.1} parent=35 // pred_check_branch
          %300 = sbr.rel (%p298) target = $region40
        $region39: #{tpu_custom_call.1} parent=35 // pred_region
          %s301 = sand.u32 %s88, 1
          %s302 = scalar_lea.sflag [#allocation3], %s301
          %s303 = sand.u32 %s88, 1
          %s304 = smul.addr %s303, 32
          %s305 = scalar_lea.vmem [#allocation2], %s304
          %306 = dma.done %s302, 512
        $region40: #{tpu_custom_call.1} parent=35 // pred_fallthru
          _
      $region36: #{tpu_custom_call.1} parent=5 // pred_fallthru
        _
    $region6: #{tpu_custom_call.1} parent=1 // loop_footer
      %s15 = sadd.s32 1, %s11
    $region7: #{tpu_custom_call.1} parent=1 // loop_footer_branch
      %10 = sbr.rel target = $region3
    $region8: #{tpu_custom_call.1} parent=1 // loop_exit
      _
    %307 = vsyncpa [#allocation3], 1
    %s308 = scalar_lea.sflag [#allocation3], 1
    %309 = vsyncpa %s308, 1

</llo_original>
